<compile_context>
chip_gen: v5e
topology: v5e:2x2
jax: 0.10.0
libtpu: 0.0.40
codegen_flags: <defaults>
</compile_context>

<pallas_src>
import jax
import jax.numpy as jnp
from jax.experimental import pallas as pl
from jax.experimental.pallas import tpu as pltpu

# ---- config mirroring AdjEmb.__init__ ---------------------------------------
DENSE1_SIZE = 1                       # dense1_size in the original file
TURK_COUNT = 4
ADD_TURKER_ONE_HOT = True
VOCAB_SIZE = 50                       # synthetic GloVe vocab (torchwordemb load replaced)
VOCAB_PAD = 64                        # vocab padded up to a sublane multiple
EMB_DIM = 50                          # synthetic GloVe dim (only used host-side now)
FEAT_DIM = (TURK_COUNT + 2) if ADD_TURKER_ONE_HOT else 2
FC_IN = DENSE1_SIZE + FEAT_DIM        # fc = Linear(dense1_size + turkCount + 2, 1)
MAX_TILE_B = 2048                     # examples per grid step (lane axis), upper bound


def adjemb_kernel(idx_ref, feats_ref, proj_ref, scal_ref, out_ref):
    # idx_ref:   (1, 1, TILE_B)        int32  adj indices, batch along lanes
    # feats_ref: (1, FEAT_DIM, TILE_B) f32    per-example features (transposed)
    # proj_ref:  (VOCAB_PAD, 1)        f32    proj[v] = vec[v] @ w1  (precomputed column)
    # scal_ref:  (3 + FEAT_DIM,)       f32    SMEM: [b1, bfc, wfc_hidden, wfc_feat[0..FEAT_DIM)]
    # out_ref:   (1, 1, TILE_B)        f32    lane-dense result row
    idx = idx_ref[0]                                                  # (1, TILE_B)
    tile_b = idx.shape[-1]

    # Embedding gather fused with linear1: select proj[idx] via an exact one-hot
    # compare + cross-sublane sum (VPU select + XLU reduce; no MXU, no emb_t temp).
    vocab_iota = jax.lax.broadcasted_iota(jnp.int32, (VOCAB_PAD, tile_b), 0)
    sel = jnp.where(vocab_iota == idx, proj_ref[...], 0.0)            # (VOCAB_PAD, TILE_B)
    h = jnp.sum(sel, axis=0, keepdims=True) + scal_ref[0]             # (1, TILE_B)
    out1 = jnp.tanh(h)                                                # EUP

    # fc over cat(feats, out1): feature weights + biases are SMEM scalars (scalar path),
    # broadcast-multiplied against the lane-major feature rows.
    feats = feats_ref[0]                                              # (FEAT_DIM, TILE_B)
    acc = out1 * scal_ref[2] + scal_ref[1]                            # hidden weight + fc bias
    for f in range(FEAT_DIM):                                         # fully unrolled (6 rows)
        acc = acc + feats[f:f + 1, :] * scal_ref[3 + f]
    out_ref[0] = acc                                                  # lane-dense write


def _pack_params(params):
    """Kernel-layout packing of the module parameters (all batch-independent)."""
    vec = params["vec"].astype(jnp.float32)                           # (VOCAB_SIZE, EMB_DIM)
    w1 = params["w1"].reshape(EMB_DIM).astype(jnp.float32)            # (EMB_DIM,)
    proj = vec @ w1                                                    # (VOCAB_SIZE,)  = vec[v]·w1
    proj_col = jnp.zeros((VOCAB_PAD, 1), jnp.float32).at[:VOCAB_SIZE, 0].set(proj)

    wfc = params["wfc"].reshape(FC_IN).astype(jnp.float32)            # feats first, hidden last
    scal = jnp.concatenate([
        jnp.stack([params["b1"][0, 0], params["bfc"][0, 0], wfc[FEAT_DIM]]),
        wfc[:FEAT_DIM],
    ]).astype(jnp.float32)                                            # (3 + FEAT_DIM,)
    return proj_col, scal


def _choose_tile_b(B):
    # Large tiles amortize the ~0.35 us per-grid-step fixed cost; keep >= 2 tiles whenever
    # possible so the "parallel" grid axis shards across v7x's two TensorCores.
    half = -(-B // 2)                              # ceil(B / 2)
    tile = ((half + 127) // 128) * 128             # round up to lane multiple
    return int(max(128, min(MAX_TILE_B, tile)))


def adjemb_forward_batched(adj_idx, feats, params):
    """Batched AdjEmb.forward. adj_idx: (B,) int indices into the frozen table
    (stand-in for self.vocab[adj]); feats: (B, FEAT_DIM) float32. Returns (B,) f32."""
    # TODO(synk): torchwordemb file loading / string->index vocab lookup has no
    # Pallas equivalent; the table is synthetic and adjectives arrive as int indices.
    B = adj_idx.shape[0]
    tile_b = _choose_tile_b(B)
    num_tiles = pl.cdiv(B, tile_b)
    Bp = num_tiles * tile_b

    idx_p = jnp.zeros((Bp,), jnp.int32).at[:B].set(adj_idx.astype(jnp.int32))
    feats_p = jnp.zeros((Bp, FEAT_DIM), jnp.float32).at[:B].set(feats.astype(jnp.float32))
    idx3 = idx_p.reshape(num_tiles, 1, tile_b)                         # batch -> lanes
    feats_t = feats_p.reshape(num_tiles, tile_b, FEAT_DIM).transpose(0, 2, 1)

    proj_col, scal = _pack_params(params)

    flops_per_tile = (3 * VOCAB_PAD * tile_b          # compare + select + sublane reduce
                      + (2 * FEAT_DIM + 3) * tile_b)  # fc mul-adds, hidden term, bias
    bytes_accessed = (idx3.size * 4 + feats_t.size * 4 + proj_col.size * 4
                      + scal.size * 4 + Bp * 4)

    out = pl.pallas_call(
        adjemb_kernel,
        out_shape=jax.ShapeDtypeStruct((num_tiles, 1, tile_b), jnp.float32),
        grid=(num_tiles,),
        in_specs=[
            pl.BlockSpec((1, 1, tile_b), lambda i: (i, 0, 0)),           # adj indices
            pl.BlockSpec((1, FEAT_DIM, tile_b), lambda i: (i, 0, 0)),    # feats (transposed)
            pl.BlockSpec((VOCAB_PAD, 1), lambda i: (0, 0)),              # proj column (resident)
            pl.BlockSpec(memory_space=pltpu.MemorySpace.SMEM),           # biases + fc weights
        ],
        out_specs=pl.BlockSpec((1, 1, tile_b), lambda i: (i, 0, 0)),
        compiler_params=pltpu.CompilerParams(
            dimension_semantics=("parallel",)),
        cost_estimate=pl.CostEstimate(
            flops=int(num_tiles * flops_per_tile),
            transcendentals=int(num_tiles * tile_b),
            bytes_accessed=int(bytes_accessed)),
    )(idx3, feats_t, proj_col, scal)

    return out.reshape(Bp)[:B]


def adjemb_forward(adj_idx, feats, params):
    """Single-example forward matching the original module signature. Returns (1,)."""
    out = adjemb_forward_batched(jnp.asarray([adj_idx], jnp.int32),
                                 jnp.asarray(feats, jnp.float32).reshape(1, FEAT_DIM), params)
    return out.reshape(1)


def adjemb_reference(adj_idx, feats, params):
    emb = params["vec"][adj_idx]                                       # (D,)
    out1 = jnp.tanh(emb @ params["w1"][0] + params["b1"][0, 0])        # scalar
    fsq = jnp.concatenate([feats, out1[None]])                         # (FC_IN,)
    return fsq @ params["wfc"][0] + params["bfc"][0, 0]                # scalar


def init_params(key):
    k_vec, k_w1, k_b1, k_wfc, k_bfc = jax.random.split(key, 5)
    vec = jax.random.normal(k_vec, (VOCAB_SIZE, EMB_DIM), jnp.float32)
    # nn.Linear default init: U(-1/sqrt(fan_in), 1/sqrt(fan_in))
    b1_bound = 1.0 / (EMB_DIM ** 0.5)
    fc_bound = 1.0 / (FC_IN ** 0.5)
    return {
        "vec": vec,
        "w1": jax.random.uniform(k_w1, (1, EMB_DIM), jnp.float32, -b1_bound, b1_bound),
        "b1": jax.random.uniform(k_b1, (1, 1), jnp.float32, -b1_bound, b1_bound),
        "wfc": jax.random.uniform(k_wfc, (1, FC_IN), jnp.float32, -fc_bound, fc_bound),
        "bfc": jax.random.uniform(k_bfc, (1, 1), jnp.float32, -fc_bound, fc_bound),
    }


if __name__ == "__main__":
    key = jax.random.PRNGKey(0)
    k_params, k_idx, k_feats = jax.random.split(key, 3)
    params = init_params(k_params)

    B = 256                                                             # -> 2 tiles of 128
    adj_idx = jax.random.randint(k_idx, (B,), 0, VOCAB_SIZE, jnp.int32)  # vocab[adj] stand-ins
    feats = jax.random.normal(k_feats, (B, FEAT_DIM), jnp.float32)       # (turkCount + 2,) each

    fwd = jax.jit(adjemb_forward_batched)
    result = jax.block_until_ready(fwd(adj_idx, feats, params))

    ref = jax.vmap(adjemb_reference, in_axes=(0, 0, None))(adj_idx, feats, params)
    assert result.shape == (B,)
    assert jnp.allclose(result, ref, atol=1e-4, rtol=1e-4), (result[:4], ref[:4])

    # single-example path (original module signature): compare against the SAME index.
    single_idx = 7
    single = jax.block_until_ready(adjemb_forward(single_idx, feats[0], params))
    single_ref = adjemb_reference(jnp.int32(single_idx), feats[0], params)
    assert single.shape == (1,)
    assert jnp.allclose(single, single_ref, atol=1e-4, rtol=1e-4), (single, single_ref)

    print("KERNEL_OK")
</pallas_src>

<mosaic_0001>
module attributes {stable_mosaic.version = 11 : i64} {
  func.func @adjemb_kernel(%arg0: i32, %arg1: memref<1x1x128xi32, #tpu.memory_space<vmem>>, %arg2: memref<1x6x128xf32, #tpu.memory_space<vmem>>, %arg3: memref<64x1xf32, #tpu.memory_space<vmem>>, %arg4: memref<9xf32, #tpu.memory_space<smem>>, %arg5: memref<1x1x128xf32, #tpu.memory_space<vmem>>) attributes {dimension_semantics = [#tpu.dimension_semantics<parallel>], iteration_bounds = array<i64: 2>, scalar_prefetch = 0 : i64, scratch_operands = 0 : i64, tpu.core_type = #tpu.core_type<tc>, window_params = [{transform_indices = @transform_0, window_bounds = array<i64: 1, 1, 128>}, {transform_indices = @transform_1, window_bounds = array<i64: 1, 6, 128>}, {pipeline_mode = #tpu.pipeline_mode<synchronous>, transform_indices = @transform_2, window_bounds = array<i64: 64, 1>}, {transform_indices = @transform_3, window_bounds = array<i64: 9>}, {transform_indices = @transform_4, window_bounds = array<i64: 1, 1, 128>}]} {
    %c0 = arith.constant 0 : index
    %c0_0 = arith.constant 0 : index
    %c0_1 = arith.constant 0 : index
    %0 = vector.load %arg1[%c0, %c0_0, %c0_1] : memref<1x1x128xi32, #tpu.memory_space<vmem>>, vector<1x1x128xi32>
    %1 = vector.shape_cast %0 : vector<1x1x128xi32> to vector<1x128xi32>
    %2 = tpu.iota {dimensions = array<i32: 0>} : vector<64x128xi32>
    %3 = vector.broadcast %1 : vector<1x128xi32> to vector<64x128xi32>
    %4 = arith.cmpi eq, %2, %3 : vector<64x128xi32>
    %c0_2 = arith.constant 0 : index
    %c0_3 = arith.constant 0 : index
    %5 = vector.load %arg3[%c0_2, %c0_3] : memref<64x1xf32, #tpu.memory_space<vmem>>, vector<64x1xf32>
    %cst = arith.constant 0.000000e+00 : f32
    %6 = vector.shape_cast %5 : vector<64x1xf32> to vector<64x1xf32>
    %7 = vector.broadcast %6 : vector<64x1xf32> to vector<64x128xf32>
    %8 = vector.broadcast %cst : f32 to vector<64x128xf32>
    %9 = arith.select %4, %7, %8 : vector<64x128xi1>, vector<64x128xf32>
    %cst_4 = arith.constant dense<0.000000e+00> : vector<128xf32>
    %10 = vector.multi_reduction <add>, %9, %cst_4 [0] : vector<64x128xf32> to vector<128xf32>
    %11 = vector.shape_cast %10 : vector<128xf32> to vector<1x128xf32>
    %c0_5 = arith.constant 0 : index
    %12 = memref.load %arg4[%c0_5] : memref<9xf32, #tpu.memory_space<smem>>
    %13 = vector.broadcast %12 : f32 to vector<1x128xf32>
    %14 = arith.addf %11, %13 : vector<1x128xf32>
    %15 = math.tanh %14 : vector<1x128xf32>
    %c0_6 = arith.constant 0 : index
    %c0_7 = arith.constant 0 : index
    %c0_8 = arith.constant 0 : index
    %16 = vector.load %arg2[%c0_6, %c0_7, %c0_8] : memref<1x6x128xf32, #tpu.memory_space<vmem>>, vector<1x6x128xf32>
    %17 = vector.shape_cast %16 : vector<1x6x128xf32> to vector<6x128xf32>
    %c2 = arith.constant 2 : index
    %18 = memref.load %arg4[%c2] : memref<9xf32, #tpu.memory_space<smem>>
    %19 = vector.broadcast %18 : f32 to vector<1x128xf32>
    %20 = arith.mulf %15, %19 : vector<1x128xf32>
    %c1 = arith.constant 1 : index
    %21 = memref.load %arg4[%c1] : memref<9xf32, #tpu.memory_space<smem>>
    %22 = vector.broadcast %21 : f32 to vector<1x128xf32>
    %23 = arith.addf %20, %22 : vector<1x128xf32>
    %24 = vector.extract_strided_slice %17 {offsets = [0, 0], sizes = [1, 128], strides = [1, 1]} : vector<6x128xf32> to vector<1x128xf32>
    %c3 = arith.constant 3 : index
    %25 = memref.load %arg4[%c3] : memref<9xf32, #tpu.memory_space<smem>>
    %26 = vector.broadcast %25 : f32 to vector<1x128xf32>
    %27 = arith.mulf %24, %26 : vector<1x128xf32>
    %28 = arith.addf %23, %27 : vector<1x128xf32>
    %29 = vector.extract_strided_slice %17 {offsets = [1, 0], sizes = [1, 128], strides = [1, 1]} : vector<6x128xf32> to vector<1x128xf32>
    %c4 = arith.constant 4 : index
    %30 = memref.load %arg4[%c4] : memref<9xf32, #tpu.memory_space<smem>>
    %31 = vector.broadcast %30 : f32 to vector<1x128xf32>
    %32 = arith.mulf %29, %31 : vector<1x128xf32>
    %33 = arith.addf %28, %32 : vector<1x128xf32>
    %34 = vector.extract_strided_slice %17 {offsets = [2, 0], sizes = [1, 128], strides = [1, 1]} : vector<6x128xf32> to vector<1x128xf32>
    %c5 = arith.constant 5 : index
    %35 = memref.load %arg4[%c5] : memref<9xf32, #tpu.memory_space<smem>>
    %36 = vector.broadcast %35 : f32 to vector<1x128xf32>
    %37 = arith.mulf %34, %36 : vector<1x128xf32>
    %38 = arith.addf %33, %37 : vector<1x128xf32>
    %39 = vector.extract_strided_slice %17 {offsets = [3, 0], sizes = [1, 128], strides = [1, 1]} : vector<6x128xf32> to vector<1x128xf32>
    %c6 = arith.constant 6 : index
    %40 = memref.load %arg4[%c6] : memref<9xf32, #tpu.memory_space<smem>>
    %41 = vector.broadcast %40 : f32 to vector<1x128xf32>
    %42 = arith.mulf %39, %41 : vector<1x128xf32>
    %43 = arith.addf %38, %42 : vector<1x128xf32>
    %44 = vector.extract_strided_slice %17 {offsets = [4, 0], sizes = [1, 128], strides = [1, 1]} : vector<6x128xf32> to vector<1x128xf32>
    %c7 = arith.constant 7 : index
    %45 = memref.load %arg4[%c7] : memref<9xf32, #tpu.memory_space<smem>>
    %46 = vector.broadcast %45 : f32 to vector<1x128xf32>
    %47 = arith.mulf %44, %46 : vector<1x128xf32>
    %48 = arith.addf %43, %47 : vector<1x128xf32>
    %49 = vector.extract_strided_slice %17 {offsets = [5, 0], sizes = [1, 128], strides = [1, 1]} : vector<6x128xf32> to vector<1x128xf32>
    %c8 = arith.constant 8 : index
    %50 = memref.load %arg4[%c8] : memref<9xf32, #tpu.memory_space<smem>>
    %51 = vector.broadcast %50 : f32 to vector<1x128xf32>
    %52 = arith.mulf %49, %51 : vector<1x128xf32>
    %53 = arith.addf %48, %52 : vector<1x128xf32>
    %c0_9 = arith.constant 0 : index
    %c0_10 = arith.constant 0 : index
    %c0_11 = arith.constant 0 : index
    %54 = vector.load %arg5[%c0_9, %c0_10, %c0_11] : memref<1x1x128xf32, #tpu.memory_space<vmem>>, vector<1x1x128xf32>
    %55 = vector.shape_cast %54 : vector<1x1x128xf32> to vector<1x128xf32>
    %56 = vector.shape_cast %53 : vector<1x128xf32> to vector<1x1x128xf32>
    tpu.vector_store %arg5[%c0_9, %c0_10, %c0_11], %56 {strides = array<i32>} : memref<1x1x128xf32, #tpu.memory_space<vmem>>, vector<1x1x128xf32>,
    return
  }
  func.func @transform_0(%arg0: i32) -> (i32, i32, i32) {
    %c0_i32 = arith.constant 0 : i32
    %c0_i32_0 = arith.constant 0 : i32
    %c0_i32_1 = arith.constant 0 : i32
    return %arg0, %c0_i32, %c0_i32_0 : i32, i32, i32
  }
  func.func @transform_1(%arg0: i32) -> (i32, i32, i32) {
    %c0_i32 = arith.constant 0 : i32
    %c0_i32_0 = arith.constant 0 : i32
    %c0_i32_1 = arith.constant 0 : i32
    return %arg0, %c0_i32, %c0_i32_0 : i32, i32, i32
  }
  func.func @transform_2(%arg0: i32) -> (i32, i32) {
    %c0_i32 = arith.constant 0 : i32
    %c0_i32_0 = arith.constant 0 : i32
    %c0_i32_1 = arith.constant 0 : i32
    return %c0_i32, %c0_i32_0 : i32, i32
  }
  func.func @transform_3(%arg0: i32) -> i32 {
    %c0_i32 = arith.constant 0 : i32
    %c0_i32_0 = arith.constant 0 : i32
    return %c0_i32 : i32
  }
  func.func @transform_4(%arg0: i32) -> (i32, i32, i32) {
    %c0_i32 = arith.constant 0 : i32
    %c0_i32_0 = arith.constant 0 : i32
    %c0_i32_1 = arith.constant 0 : i32
    return %arg0, %c0_i32, %c0_i32_0 : i32, i32, i32
  }
}

</mosaic_0001>

<llo_original>
// kernel: adjemb_forward_batched.1
$region0: #{adjemb_forward_batched.1}
  #allocation0 [shape = 'u32[]', space=smem, size = 0x4, offset = 0x4, fixed_abs, tag = 'smem constant byte address 0x4 - core index']
  #allocation1 [shape = 'u32[72,128]{1,0:T(1,128)}', space=vmem, size = 0x9000, scoped, tag = 'internal scratch']
  %s0 = inlined_call_operand.vmem [shape: s32[2,1,128], index: 0, kind: input, shape index: {}]
  %s1 = inlined_call_operand.vmem [shape: f32[2,6,128], index: 1, kind: input, shape index: {}]
  %s2 = inlined_call_operand.vmem [shape: f32[64,1], index: 2, kind: input, shape index: {}]
  %s3 = inlined_call_operand.vmem [shape: f32[9], index: 3, kind: input, shape index: {}]
  %s4 = inlined_call_operand.hbm [shape: f32[2,1,128], index: 4, kind: output, shape index: {}]
  %s5 = sld [smem:[#allocation0]]
  $region53: #{adjemb_forward_batched.1} parent=0
    _
  %s7 = ssub.s32 1, %s5
  %s8 = scalar_select 0, %s7, %s5
  $region1: #{adjemb_forward_batched.1} parent=0
    #allocation2 [shape = 'u8[512]{0}', space=smem, size = 0x200, scoped, tag = 'input window, operand 3, single buffered']
    #allocation3 [shape = 's32[2]{0}', space=sflag, size = 0x8, scoped, tag = 'scoped memory for adjemb_forward_batched.1']
    #allocation4 [shape = 's32[2]{0}', space=sflag, size = 0x8, scoped, tag = 'scoped memory for adjemb_forward_batched.1']
    #allocation5 [shape = 'u8[1024]{0}', space=vmem, size = 0x400, scoped, tag = 'output window, operand 0']
    %9 = vsyncpa [#allocation4], 0
    %10 = vsyncpa [#allocation3], 0
    %s11 = scalar_lea.sflag [#allocation3], 1
    %12 = vsyncpa %s11, 0
    loop: start=0, step=1, limit=4
    $region2: #{adjemb_forward_batched.1} parent=1 // loop_pre_header
      _
    $region3: #{adjemb_forward_batched.1} parent=1 // loop_header
      %s14 = sphi 0, %s18
      %p15 = scmp.ge.s32.totalorder %s14, 4
      %s24 = sphi 0, %s26
      %s27 = sphi 0, %s24
      %s28 = sphi 0, %s27
      %s44 = sphi 0, %s28
      %s50 = sphi 0, %s52
      %s53 = sphi 0, %s50
      %s54 = sphi 0, %s53
      %s70 = sphi 0, %s54
      %s74 = sphi 0, %s74
      %s76 = sphi 0, %s74
      %s77 = sphi 0, %s76
      %s91 = sphi 0, %s77
      %s95 = sphi 0, %s95
      %s97 = sphi 0, %s95
      %s98 = sphi 0, %s97
      %s112 = sphi 0, %s98
      %s118 = sphi 0, %s120
      %s121 = sphi 0, %s118
      %s122 = sphi 0, %s121
      %s138 = sphi 0, %s122
    $region4: #{adjemb_forward_batched.1} parent=1 // loop_header_branch
      %17 = sbr.rel (%p15) target = $region8
    $region5: #{adjemb_forward_batched.1} parent=1 // loop_body
      %s19 = ssub.s32 %s14, 1
      %s20 = ssub.s32 %s14, 2
      %s21 = sadd.s32 %s14, 1
      %s22 = ssub.s32 %s14, %s21
      %p23 = scmp.eq.s32.totalorder %s22, 0
      %s25 = sadd.s32 %s24, 1
      %s26 = scalar_select %p23, %s24, %s25
      %p29 = pneg %p23
      %p30 = scmp.eq.s32.totalorder %s14, 1
      %p31 = por %p29, %p30
      %p32 = scmp.ne.s32.totalorder %s24, %s27
      %p33 = scmp.eq.s32.totalorder %s14, 0
      %p34 = por %p32, %p33
      %p35 = scmp.ne.s32.totalorder %s24, %s27
      %p36 = scmp.eq.s32.totalorder %s19, 1
      %p37 = por %p35, %p36
      %p38 = scmp.ne.s32.totalorder %s27, %s28
      %p39 = scmp.eq.s32.totalorder %s19, 0
      %p40 = por %p38, %p39
      %p41 = scmp.ne.s32.totalorder %s27, %s28
      %p42 = scmp.eq.s32.totalorder %s20, 1
      %p43 = por %p41, %p42
      %p45 = scmp.ne.s32.totalorder %s28, %s44
      %p46 = scmp.eq.s32.totalorder %s20, 0
      %p47 = por %p45, %p46
      %s48 = ssub.s32 %s14, %s21
      %p49 = scmp.eq.s32.totalorder %s48, 0
      %s51 = sadd.s32 %s50, 1
      %s52 = scalar_select %p49, %s50, %s51
      %p55 = pneg %p49
      %p56 = scmp.eq.s32.totalorder %s14, 1
      %p57 = por %p55, %p56
      %p58 = scmp.ne.s32.totalorder %s50, %s53
      %p59 = scmp.eq.s32.totalorder %s14, 0
      %p60 = por %p58, %p59
      %p61 = scmp.ne.s32.totalorder %s50, %s53
      %p62 = scmp.eq.s32.totalorder %s19, 1
      %p63 = por %p61, %p62
      %p64 = scmp.ne.s32.totalorder %s53, %s54
      %p65 = scmp.eq.s32.totalorder %s19, 0
      %p66 = por %p64, %p65
      %p67 = scmp.ne.s32.totalorder %s53, %s54
      %p68 = scmp.eq.s32.totalorder %s20, 1
      %p69 = por %p67, %p68
      %p71 = scmp.ne.s32.totalorder %s54, %s70
      %p72 = scmp.eq.s32.totalorder %s20, 0
      %p73 = por %p71, %p72
      %s75 = sadd.s32 %s74, 1
      %p78 = scmp.eq.s32.totalorder %s14, 1
      %p79 = scmp.ne.s32.totalorder %s74, %s76
      %p80 = scmp.eq.s32.totalorder %s14, 0
      %p81 = por %p79, %p80
      %p82 = scmp.ne.s32.totalorder %s74, %s76
      %p83 = scmp.eq.s32.totalorder %s19, 1
      %p84 = por %p82, %p83
      %p85 = scmp.ne.s32.totalorder %s76, %s77
      %p86 = scmp.eq.s32.totalorder %s19, 0
      %p87 = por %p85, %p86
      %p88 = scmp.ne.s32.totalorder %s76, %s77
      %p89 = scmp.eq.s32.totalorder %s20, 1
      %p90 = por %p88, %p89
      %p92 = scmp.ne.s32.totalorder %s77, %s91
      %p93 = scmp.eq.s32.totalorder %s20, 0
      %p94 = por %p92, %p93
      %s96 = sadd.s32 %s95, 1
      %p99 = scmp.eq.s32.totalorder %s14, 1
      %p100 = scmp.ne.s32.totalorder %s95, %s97
      %p101 = scmp.eq.s32.totalorder %s14, 0
      %p102 = por %p100, %p101
      %p103 = scmp.ne.s32.totalorder %s95, %s97
      %p104 = scmp.eq.s32.totalorder %s19, 1
      %p105 = por %p103, %p104
      %p106 = scmp.ne.s32.totalorder %s97, %s98
      %p107 = scmp.eq.s32.totalorder %s19, 0
      %p108 = por %p106, %p107
      %p109 = scmp.ne.s32.totalorder %s97, %s98
      %p110 = scmp.eq.s32.totalorder %s20, 1
      %p111 = por %p109, %p110
      %p113 = scmp.ne.s32.totalorder %s98, %s112
      %p114 = scmp.eq.s32.totalorder %s20, 0
      %p115 = por %p113, %p114
      %s116 = ssub.s32 %s14, %s21
      %p117 = scmp.eq.s32.totalorder %s116, 0
      %s119 = sadd.s32 %s118, 1
      %s120 = scalar_select %p117, %s118, %s119
      %p123 = pneg %p117
      %p124 = scmp.eq.s32.totalorder %s14, 1
      %p125 = por %p123, %p124
      %p126 = scmp.ne.s32.totalorder %s118, %s121
      %p127 = scmp.eq.s32.totalorder %s14, 0
      %p128 = por %p126, %p127
      %p129 = scmp.ne.s32.totalorder %s118, %s121
      %p130 = scmp.eq.s32.totalorder %s19, 1
      %p131 = por %p129, %p130
      %p132 = scmp.ne.s32.totalorder %s121, %s122
      %p133 = scmp.eq.s32.totalorder %s19, 0
      %p134 = por %p132, %p133
      %p135 = scmp.ne.s32.totalorder %s121, %s122
      %p136 = scmp.eq.s32.totalorder %s20, 1
      %p137 = por %p135, %p136
      %p139 = scmp.ne.s32.totalorder %s122, %s138
      %p140 = scmp.eq.s32.totalorder %s20, 0
      %p141 = por %p139, %p140
      %p142 = scmp.le.s32.totalorder 1, %s14
      %p143 = scmp.lt.s32.totalorder %s14, 3
      %p144 = pnand %p142, %p143
      %p145 = pneg %p144
      // Predicated region
      $region9: #{adjemb_forward_batched.1} parent=5 // pred_check
        _
      $region10: #{adjemb_forward_batched.1} parent=5 // pred_check_branch
        %147 = sbr.rel (%p144) target = $region12
      $region11: #{adjemb_forward_batched.1} parent=5 // pred_region
        %s148 = ssub.s32 %s14, 1
        // Predicated region
        $region13: #{adjemb_forward_batched.1} parent=11 // pred_check
          %p149 = pneg %p87
        $region14: #{adjemb_forward_batched.1} parent=11 // pred_check_branch
          %151 = sbr.rel (%p149) target = $region16
        $region15: #{adjemb_forward_batched.1} parent=11 // pred_region
          _
        $region16: #{adjemb_forward_batched.1} parent=11 // pred_fallthru
          _
        // Predicated region
        $region17: #{adjemb_forward_batched.1} parent=11 // pred_check
          %p152 = pneg %p108
        $region18: #{adjemb_forward_batched.1} parent=11 // pred_check_branch
          %154 = sbr.rel (%p152) target = $region20
        $region19: #{adjemb_forward_batched.1} parent=11 // pred_region
          %156 = vsyncadd [#allocation4], 0
          %s158 = sshll.u32 %s3, 4
          %s159 = int_to_ptr.vmem [resolvable:$true] %s158
          %161 = dma.vmem_to_smem %s159, 16, [#allocation2], [#allocation4]
        $region20: #{adjemb_forward_batched.1} parent=11 // pred_fallthru
          _
      $region12: #{adjemb_forward_batched.1} parent=5 // pred_fallthru
        _
      %p162 = scmp.lt.s32.totalorder %s14, 2
      // Predicated region
      $region21: #{adjemb_forward_batched.1} parent=5 // pred_check
        %p163 = pneg %p162
      $region22: #{adjemb_forward_batched.1} parent=5 // pred_check_branch
        %165 = sbr.rel (%p163) target = $region24
      $region23: #{adjemb_forward_batched.1} parent=5 // pred_region
        // Predicated region
        $region25: #{adjemb_forward_batched.1} parent=23 // pred_check
          %p166 = pneg %p34
        $region26: #{adjemb_forward_batched.1} parent=23 // pred_check_branch
          %168 = sbr.rel (%p166) target = $region28
        $region27: #{adjemb_forward_batched.1} parent=23 // pred_region
          %p169 = scmp.lt.s32.totalorder %s14, 1
          %s170 = scalar_select %p169, %s14, 1
          %s171 = scalar_lea.vmem %s0, %s170
        $region28: #{adjemb_forward_batched.1} parent=23 // pred_fallthru
          _
        // Predicated region
        $region29: #{adjemb_forward_batched.1} parent=23 // pred_check
          %p172 = pneg %p60
        $region30: #{adjemb_forward_batched.1} parent=23 // pred_check_branch
          %174 = sbr.rel (%p172) target = $region32
        $region31: #{adjemb_forward_batched.1} parent=23 // pred_region
          %p175 = scmp.lt.s32.totalorder %s14, 1
          %s176 = scalar_select %p175, %s14, 1
          %s177 = smul.addr %s176, 8
          %s178 = scalar_lea.vmem %s1, %s177
        $region32: #{adjemb_forward_batched.1} parent=23 // pred_fallthru
          _
      $region24: #{adjemb_forward_batched.1} parent=5 // pred_fallthru
        _
      %p179 = scmp.le.s32.totalorder 1, %s14
      %p180 = scmp.lt.s32.totalorder %s14, 3
      %p181 = pnand %p179, %p180
      %p182 = pneg %p181
      // Predicated region
      $region33: #{adjemb_forward_batched.1} parent=5 // pred_check
        _
      $region34: #{adjemb_forward_batched.1} parent=5 // pred_check_branch
        %184 = sbr.rel (%p181) target = $region36
      $region35: #{adjemb_forward_batched.1} parent=5 // pred_region
        %s185 = ssub.s32 %s14, 1
        // Predicated region
        $region37: #{adjemb_forward_batched.1} parent=35 // pred_check
          %p186 = pneg %p108
        $region38: #{adjemb_forward_batched.1} parent=35 // pred_check_branch
          %188 = sbr.rel (%p186) target = $region40
        $region39: #{adjemb_forward_batched.1} parent=35 // pred_region
          %190 = dma.done [#allocation4], 16
        $region40: #{adjemb_forward_batched.1} parent=35 // pred_fallthru
          _
        %191 = sfence
        %p192 = scmp.lt.s32.totalorder %s19, 1
        %s193 = scalar_select %p192, %s19, 1
        %s194 = scalar_lea.vmem %s0, %s193
        %p195 = pneg %p40
        %p196 = pneg %p37
        %p197 = scmp.lt.s32.totalorder %s19, 1
        %s198 = scalar_select %p197, %s19, 1
        %s199 = smul.addr %s198, 8
        %s200 = scalar_lea.vmem %s1, %s199
        %p201 = pneg %p66
        %p202 = pneg %p63
        %p203 = pneg %p87
        %p204 = pneg %p84
        %p205 = pneg %p108
        %p206 = pneg %p105
        %p207 = pneg %p134
        %p208 = pneg %p131
        %s209 = sand.u32 %s121, 1
        %s210 = scalar_lea.sflag [#allocation3], %s209
        %s211 = sand.u32 %s121, 1
        %s212 = scalar_lea.vmem [#allocation5], %s211
        %p213 = scmp.lt.s32.totalorder %s19, 1
        %s214 = scalar_select %p213, %s19, 1
        %s215 = scalar_lea.vmem %s0, %s214
        %p216 = scmp.lt.s32.totalorder %s19, 1
        %s217 = scalar_select %p216, %s19, 1
        %s218 = smul.addr %s217, 8
        %s219 = scalar_lea.vmem %s1, %s218
        %v220 = vld [vmem:[%s215] sm:$0x1]
        %v221 = vlaneseq
        %v222 = vshrl.u32 %v221, 7
        %v223 = vadd.s32 %v222, 8
        %v224 = vadd.s32 %v222, 16
        %v225 = vadd.s32 %v222, 24
        %v226 = vadd.s32 %v222, 32
        %v227 = vadd.s32 %v222, 40
        %v228 = vadd.s32 %v222, 48
        %v229 = vadd.s32 %v222, 56
        %v230 = vperm.slane %v220, 0
        %vm231 = vcmp.eq.s32.totalorder %v222, %v230
        %vm232 = vcmp.eq.s32.totalorder %v223, %v230
        %vm233 = vcmp.eq.s32.totalorder %v224, %v230
        %vm234 = vcmp.eq.s32.totalorder %v225, %v230
        %vm235 = vcmp.eq.s32.totalorder %v226, %v230
        %vm236 = vcmp.eq.s32.totalorder %v227, %v230
        %vm237 = vcmp.eq.s32.totalorder %v228, %v230
        %vm238 = vcmp.eq.s32.totalorder %v229, %v230
        %v239 = vld [vmem:[%s2] sm:$0xff]
        %v240 = vld [vmem:[%s2 + $0x8] sm:$0xff]
        %v241 = vld [vmem:[%s2 + $0x10] sm:$0xff]
        %v242 = vld [vmem:[%s2 + $0x18] sm:$0xff]
        %v243 = vld [vmem:[%s2 + $0x20] sm:$0xff]
        %v244 = vld [vmem:[%s2 + $0x28] sm:$0xff]
        %v245 = vld [vmem:[%s2 + $0x30] sm:$0xff]
        %v246 = vld [vmem:[%s2 + $0x38] sm:$0xff]
        %248 = vset.pattern.permute.xlu0 0
        %249 = vperm.xlu0 %248, %v239
        %v250 = vpop.permute.xlu0 %249
        %253 = vset.pattern.permute.xlu0 0
        %254 = vperm.xlu0 %253, %v240
        %v255 = vpop.permute.xlu0 %254
        %258 = vset.pattern.permute.xlu0 0
        %259 = vperm.xlu0 %258, %v241
        %v260 = vpop.permute.xlu0 %259
        %263 = vset.pattern.permute.xlu0 0
        %264 = vperm.xlu0 %263, %v242
        %v265 = vpop.permute.xlu0 %264
        %268 = vset.pattern.permute.xlu0 0
        %269 = vperm.xlu0 %268, %v243
        %v270 = vpop.permute.xlu0 %269
        %273 = vset.pattern.permute.xlu0 0
        %274 = vperm.xlu0 %273, %v244
        %v275 = vpop.permute.xlu0 %274
        %278 = vset.pattern.permute.xlu0 0
        %279 = vperm.xlu0 %278, %v245
        %v280 = vpop.permute.xlu0 %279
        %283 = vset.pattern.permute.xlu0 0
        %284 = vperm.xlu0 %283, %v246
        %v285 = vpop.permute.xlu0 %284
        %v287 = vsel %vm231, %v250, 0.0
        %v288 = vsel %vm232, %v255, 0.0
        %v289 = vsel %vm233, %v260, 0.0
        %v290 = vsel %vm234, %v265, 0.0
        %v291 = vsel %vm235, %v270, 0.0
        %v292 = vsel %vm236, %v275, 0.0
        %v293 = vsel %vm237, %v280, 0.0
        %v294 = vsel %vm238, %v285, 0.0
        %v295 = vadd.f32 %v287, %v288
        %v296 = vadd.f32 %v295, %v289
        %v297 = vadd.f32 %v296, %v290
        %v298 = vadd.f32 %v297, %v291
        %v299 = vadd.f32 %v298, %v292
        %v300 = vadd.f32 %v299, %v293
        %v301 = vadd.f32 %v300, %v294
        %v302 = vrot.slane %v301, 4
        %v303 = vadd.f32 %v301, %v302
        %v304 = vrot.slane %v303, 2
        %v305 = vadd.f32 %v303, %v304
        %v306 = vrot.slane %v305, 1
        %v307 = vadd.f32 %v305, %v306
        %s308 = sld [smem:[#allocation2]]
        %v309 = vstv %s308
        %v310 = vadd.f32 %v307, %v309
        %v311 = vtanh.pop %v310
        %v312 = vld [vmem:[%s219] sm:$0x3f]
        %s313 = sld [smem:[#allocation2 + $0x2]]
        %v314 = vstv %s313
        %v315 = vmul.f32 %v311, %v314
        %s316 = sld [smem:[#allocation2 + $0x1]]
        %v317 = vstv %s316
        %v318 = vadd.f32 %v315, %v317
        %s319 = sld [smem:[#allocation2 + $0x3]]
        %v320 = vstv %s319
        %v321 = vmul.f32 %v312, %v320
        %v322 = vadd.f32 %v318, %v321
        %s323 = sld [smem:[#allocation2 + $0x4]]
        %v324 = vstv %s323
        %v325 = vmul.f32 %v312, %v324
        %v327 = vrot.slane %v325, 1
        %v329 = vadd.f32 %v322, %v327
        %s330 = sld [smem:[#allocation2 + $0x5]]
        %v331 = vstv %s330
        %v332 = vmul.f32 %v312, %v331
        %v334 = vrot.slane %v332, 2
        %v336 = vadd.f32 %v329, %v334
        %s337 = sld [smem:[#allocation2 + $0x6]]
        %v338 = vstv %s337
        %v339 = vmul.f32 %v312, %v338
        %v341 = vrot.slane %v339, 3
        %v343 = vadd.f32 %v336, %v341
        %s344 = sld [smem:[#allocation2 + $0x7]]
        %v345 = vstv %s344
        %v346 = vmul.f32 %v312, %v345
        %v348 = vrot.slane %v346, 4
        %v350 = vadd.f32 %v343, %v348
        %s351 = sld [smem:[#allocation2 + $0x8]]
        %v352 = vstv %s351
        %v353 = vmul.f32 %v312, %v352
        %v355 = vrot.slane %v353, 5
        %v357 = vadd.f32 %v350, %v355
        %358 = vst [vmem:[%s212] sm:$0x1] %v357
        %s359 = sand.u32 %s121, 1
        %s360 = scalar_lea.sflag [#allocation3], %s359
        %s361 = sand.u32 %s121, 1
        %s362 = scalar_lea.vmem [#allocation5], %s361
        // Predicated region
        $region41: #{adjemb_forward_batched.1} parent=35 // pred_check
          %p363 = pneg %p131
        $region42: #{adjemb_forward_batched.1} parent=35 // pred_check_branch
          %365 = sbr.rel (%p363) target = $region44
        $region43: #{adjemb_forward_batched.1} parent=35 // pred_region
          %367 = vsyncadd %s360, 0
          %s368 = scalar_lea.hbm %s4, %s19
          %s370 = sshll.u32 %s362, 4
          %s371 = int_to_ptr.vmem [resolvable:$true] %s370
          %s372 = sshll.u32 %s368, 4
          %s373 = int_to_ptr.hbm [resolvable:$true] %s372
          %375 = dma.vmem_to_hbm [thread:$0]  %s371, 16, %s373, %s360
        $region44: #{adjemb_forward_batched.1} parent=35 // pred_fallthru
          _
      $region36: #{adjemb_forward_batched.1} parent=5 // pred_fallthru
        _
      %p376 = scmp.le.s32.totalorder 2, %s14
      // Predicated region
      $region45: #{adjemb_forward_batched.1} parent=5 // pred_check
        %p377 = pneg %p376
      $region46: #{adjemb_forward_batched.1} parent=5 // pred_check_branch
        %379 = sbr.rel (%p377) target = $region48
      $region47: #{adjemb_forward_batched.1} parent=5 // pred_region
        %s380 = ssub.s32 %s14, 2
        // Predicated region
        $region49: #{adjemb_forward_batched.1} parent=47 // pred_check
          %p381 = pneg %p137
        $region50: #{adjemb_forward_batched.1} parent=47 // pred_check_branch
          %383 = sbr.rel (%p381) target = $region52
        $region51: #{adjemb_forward_batched.1} parent=47 // pred_region
          %s384 = sand.u32 %s122, 1
          %s385 = scalar_lea.sflag [#allocation3], %s384
          %s386 = sand.u32 %s122, 1
          %s387 = scalar_lea.vmem [#allocation5], %s386
          %389 = dma.done %s385, 16
        $region52: #{adjemb_forward_batched.1} parent=47 // pred_fallthru
          _
      $region48: #{adjemb_forward_batched.1} parent=5 // pred_fallthru
        _
    $region6: #{adjemb_forward_batched.1} parent=1 // loop_footer
      %s18 = sadd.s32 1, %s14
    $region7: #{adjemb_forward_batched.1} parent=1 // loop_footer_branch
      %13 = sbr.rel target = $region3
    $region8: #{adjemb_forward_batched.1} parent=1 // loop_exit
      _
    %390 = vsyncpa [#allocation3], 1
    %s391 = scalar_lea.sflag [#allocation3], 1
    %392 = vsyncpa %s391, 1
    %393 = vsyncpa [#allocation4], 1
    %s394 = scalar_lea.sflag [#allocation4], 1
    %395 = vsyncpa %s394, 1

</llo_original>
